<compile_context>
chip_gen: v7x
topology: tpu7x:2x2x1
jax: 0.10.0
libtpu: 0.0.40
codegen_flags: <defaults>
</compile_context>

<pallas_src>
import functools

import jax
import jax.numpy as jnp
from jax import lax
from jax.experimental import pallas as pl
from jax.experimental.pallas import tpu as pltpu


def _triplet_kernel(x_row_ref, x_col_ref, t_col_ref, t_row_ref,
                    sq_col_ref, sq_row_ref, loss_ref, ap2_ref, an2_ref,
                    *, n_valid, margin, mxu_bf16):
    j = pl.program_id(1)
    n_col_steps = pl.num_programs(1)

    @pl.when(j == 0)
    def _():
        ap2_ref[...] = jnp.full_like(ap2_ref, -jnp.inf)   # running max of squared pos dist
        an2_ref[...] = jnp.full_like(an2_ref, jnp.inf)    # running min of squared neg dist

    x_i = x_row_ref[...]                                  # (tm, Dp) f32
    x_j = x_col_ref[...]                                  # (tn, Dp) f32
    if mxu_bf16:  # v6e/v7x MXU throughput option (f32 accumulate)
        x_i = x_i.astype(jnp.bfloat16)
        x_j = x_j.astype(jnp.bfloat16)
    gram = lax.dot_general(                               # (tm, tn) on the MXU
        x_i, x_j, (((1,), (1,)), ((), ())),
        preferred_element_type=jnp.float32)

    # Squared pairwise distance block: ||xi||^2 + ||xj||^2 - 2 xi.xj
    dist2 = (sq_col_ref[...] + sq_row_ref[...]) - 2.0 * gram   # (tm, tn)

    # Positive mask for this block; padded columns are never valid.
    same = t_col_ref[...] == t_row_ref[...]               # (tm, tn) bool
    tm, tn = gram.shape
    col_ids = lax.broadcasted_iota(jnp.int32, (tm, tn), 1) + j * tn
    valid = col_ids < n_valid

    ap_cand = jnp.where(same & valid, dist2, -jnp.inf)
    an_cand = jnp.where(jnp.logical_and(jnp.logical_not(same), valid), dist2, jnp.inf)

    ap2_ref[...] = jnp.maximum(ap2_ref[...], jnp.max(ap_cand, axis=1, keepdims=True))
    an2_ref[...] = jnp.minimum(an2_ref[...], jnp.min(an_cand, axis=1, keepdims=True))

    @pl.when(j == n_col_steps - 1)
    def _():
        # sqrt only on the mined (tile, 1) vectors, with the 1e-12 clamp of the
        # reference implementation.  If a row has no negative, an2 stays +inf and
        # the per-sample loss relu's to 0 (matches the JAX reference).
        dist_ap = jnp.sqrt(jnp.maximum(ap2_ref[...], 1e-12))
        dist_an = jnp.sqrt(jnp.maximum(an2_ref[...], 1e-12))
        loss_ref[...] = jnp.maximum(dist_ap - dist_an + jnp.float32(margin), 0.0)


def _round_up(x, m):
    return (x + m - 1) // m * m


def triplet_loss_pallas(inputs, targets, margin=0.3, block=128, mxu_bf16=False):
    """inputs: (N, D) float, targets: (N,) int labels. Returns scalar f32 loss.

    block=128 is safe on all chips (v5e MXU is 4x128^2); pass block=256 on
    v6e/v7x for better MXU utilization at large N.
    """
    n, d = inputs.shape
    dp = _round_up(d, 128)                       # lane-dense / MXU-friendly K

    if n <= block:
        tile = _round_up(n, 8)                   # single tile: full-extent blocks
    else:
        assert block % 128 == 0, "block must be a multiple of 128 when tiling"
        tile = block
    n_pad = _round_up(n, tile)
    n_tiles = n_pad // tile

    x = inputs.astype(jnp.float32)
    xp = jnp.pad(x, ((0, n_pad - n), (0, dp - d)))              # zero pad is exact
    tp = jnp.pad(targets.astype(jnp.int32), (0, n_pad - n))

    # Tiny O(N*D) glue: squared norms + both layouts of labels/norms so the
    # kernel never needs an in-kernel transpose.
    sq = jnp.sum(xp * xp, axis=1)
    sq_col = sq.reshape(n_pad, 1)
    sq_row = sq.reshape(1, n_pad)
    t_col = tp.reshape(n_pad, 1)
    t_row = tp.reshape(1, n_pad)

    kernel = functools.partial(_triplet_kernel, n_valid=n, margin=float(margin),
                               mxu_bf16=mxu_bf16)

    per_row = pl.pallas_call(
        kernel,
        out_shape=jax.ShapeDtypeStruct((n_pad, 1), jnp.float32),
        grid_spec=pltpu.PrefetchScalarGridSpec(
            num_scalar_prefetch=0,
            grid=(n_tiles, n_tiles),                              # (rows, cols); cols is the reduction
            in_specs=[
                pl.BlockSpec((tile, dp), lambda i, j: (i, 0)),    # x row tile
                pl.BlockSpec((tile, dp), lambda i, j: (j, 0)),    # x col tile
                pl.BlockSpec((tile, 1), lambda i, j: (i, 0)),     # labels, column layout
                pl.BlockSpec((1, tile), lambda i, j: (0, j)),     # labels, row layout
                pl.BlockSpec((tile, 1), lambda i, j: (i, 0)),     # ||x||^2, column layout
                pl.BlockSpec((1, tile), lambda i, j: (0, j)),     # ||x||^2, row layout
            ],
            out_specs=pl.BlockSpec((tile, 1), lambda i, j: (i, 0)),
            scratch_shapes=[pltpu.VMEM((tile, 1), jnp.float32),   # running max dist_ap^2
                            pltpu.VMEM((tile, 1), jnp.float32)],  # running min dist_an^2
        ),
        compiler_params=pltpu.CompilerParams(
            dimension_semantics=("parallel", "arbitrary"),
            vmem_limit_bytes=32 * 1024 * 1024,
        ),
    )(xp, xp, t_col, t_row, sq_col, sq_row)

    # Final mean over the real rows (padded rows discarded).
    return jnp.mean(per_row[:n, 0])


def _reference(inputs, targets, margin=0.3):
    # Pure-JAX reference mirroring the PyTorch forward.
    x = inputs.astype(jnp.float32)
    sq = jnp.sum(x * x, axis=1, keepdims=True)
    dist2 = sq + sq.T - 2.0 * (x @ x.T)
    dist = jnp.sqrt(jnp.maximum(dist2, 1e-12))
    mask = targets[:, None] == targets[None, :]
    dist_ap = jnp.max(jnp.where(mask, dist, -jnp.inf), axis=1)
    dist_an = jnp.min(jnp.where(mask, jnp.inf, dist), axis=1)
    return jnp.mean(jnp.maximum(dist_ap - dist_an + margin, 0.0))


if __name__ == "__main__":
    key = jax.random.PRNGKey(0)
    k1, k2 = jax.random.split(key)
    margin = 0.3

    # Tolerance note: the kernel's f32 MXU Gram matmul and the reference's XLA
    # default-precision matmul can differ at the ~1e-3 level; use a tolerance
    # that covers that without masking real bugs.
    TOL = dict(rtol=2e-2, atol=2e-2)

    # Case 1: module-scale toy shapes (batch=8, feat=32) -> single-tile grid.
    n, d = 8, 32
    inputs = jax.random.normal(k1, (n, d), dtype=jnp.float32)
    targets = jnp.array([0, 0, 1, 1, 0, 1, 0, 1], dtype=jnp.int32)
    loss = jax.block_until_ready(triplet_loss_pallas(inputs, targets, margin=margin))
    ref = jax.block_until_ready(_reference(inputs, targets, margin=margin))
    assert jnp.allclose(loss, ref, **TOL), (loss, ref)

    # Case 2: non-aligned N/D to exercise padding + the tiled (2, 2) grid path.
    n2, d2 = 160, 96
    inputs2 = jax.random.normal(k2, (n2, d2), dtype=jnp.float32)
    targets2 = jnp.arange(n2, dtype=jnp.int32) % 4
    loss2 = jax.block_until_ready(triplet_loss_pallas(inputs2, targets2, margin=margin))
    ref2 = jax.block_until_ready(_reference(inputs2, targets2, margin=margin))
    assert jnp.allclose(loss2, ref2, **TOL), (loss2, ref2)

    print("KERNEL_OK")
</pallas_src>

<mosaic_0001>
module attributes {stable_mosaic.version = 11 : i64} {
  func.func @_triplet_kernel(%arg0: i32, %arg1: i32, %arg2: memref<8x128xf32, #tpu.memory_space<vmem>>, %arg3: memref<8x128xf32, #tpu.memory_space<vmem>>, %arg4: memref<8x1xi32, #tpu.memory_space<vmem>>, %arg5: memref<1x8xi32, #tpu.memory_space<vmem>>, %arg6: memref<8x1xf32, #tpu.memory_space<vmem>>, %arg7: memref<1x8xf32, #tpu.memory_space<vmem>>, %arg8: memref<8x1xf32, #tpu.memory_space<vmem>>, %arg9: memref<8x1xf32, #tpu.memory_space<vmem>>, %arg10: memref<8x1xf32, #tpu.memory_space<vmem>>) attributes {dimension_semantics = [#tpu.dimension_semantics<parallel>, #tpu.dimension_semantics<arbitrary>], iteration_bounds = array<i64: 1, 1>, scalar_prefetch = 0 : i64, scratch_operands = 2 : i64, tpu.core_type = #tpu.core_type<tc>, window_params = [{transform_indices = @transform_0, window_bounds = array<i64: 8, 128>}, {transform_indices = @transform_1, window_bounds = array<i64: 8, 128>}, {transform_indices = @transform_2, window_bounds = array<i64: 8, 1>}, {transform_indices = @transform_3, window_bounds = array<i64: 1, 8>}, {transform_indices = @transform_4, window_bounds = array<i64: 8, 1>}, {transform_indices = @transform_5, window_bounds = array<i64: 1, 8>}, {transform_indices = @transform_6, window_bounds = array<i64: 8, 1>}]} {
    %c0_i32 = arith.constant 0 : i32
    %0 = arith.cmpi eq, %arg1, %c0_i32 : i32
    %1 = arith.extui %0 : i1 to i32
    %c0_i32_0 = arith.constant 0 : i32
    %2 = arith.cmpi ne, %1, %c0_i32_0 : i32
    scf.if %2 {
      %cst_29 = arith.constant 0xFF800000 : f32
      %45 = vector.broadcast %cst_29 : f32 to vector<8x1xf32>
      %c0_30 = arith.constant 0 : index
      %c0_31 = arith.constant 0 : index
      %46 = vector.load %arg9[%c0_30, %c0_31] : memref<8x1xf32, #tpu.memory_space<vmem>>, vector<8x1xf32>
      tpu.vector_store %arg9[%c0_30, %c0_31], %45 {strides = array<i32>} : memref<8x1xf32, #tpu.memory_space<vmem>>, vector<8x1xf32>,
      %cst_32 = arith.constant 0x7F800000 : f32
      %47 = vector.broadcast %cst_32 : f32 to vector<8x1xf32>
      %c0_33 = arith.constant 0 : index
      %c0_34 = arith.constant 0 : index
      %48 = vector.load %arg10[%c0_33, %c0_34] : memref<8x1xf32, #tpu.memory_space<vmem>>, vector<8x1xf32>
      tpu.vector_store %arg10[%c0_33, %c0_34], %47 {strides = array<i32>} : memref<8x1xf32, #tpu.memory_space<vmem>>, vector<8x1xf32>,
    } else {
    }
    %c0 = arith.constant 0 : index
    %c0_1 = arith.constant 0 : index
    %3 = vector.load %arg2[%c0, %c0_1] : memref<8x128xf32, #tpu.memory_space<vmem>>, vector<8x128xf32>
    %c0_2 = arith.constant 0 : index
    %c0_3 = arith.constant 0 : index
    %4 = vector.load %arg3[%c0_2, %c0_3] : memref<8x128xf32, #tpu.memory_space<vmem>>, vector<8x128xf32>
    %cst = arith.constant dense<0.000000e+00> : vector<8x8xf32>
    %5 = tpu.matmul %3, %4, %cst {dimension_numbers = #tpu.dot_dimension_numbers<[1], [1], [0], [0], [0, 0, 1, 0], [], []>} : vector<8x128xf32>, vector<8x128xf32>, vector<8x8xf32> -> vector<8x8xf32>
    %c0_4 = arith.constant 0 : index
    %c0_5 = arith.constant 0 : index
    %6 = vector.load %arg6[%c0_4, %c0_5] : memref<8x1xf32, #tpu.memory_space<vmem>>, vector<8x1xf32>
    %c0_6 = arith.constant 0 : index
    %c0_7 = arith.constant 0 : index
    %7 = vector.load %arg7[%c0_6, %c0_7] : memref<1x8xf32, #tpu.memory_space<vmem>>, vector<1x8xf32>
    %8 = vector.broadcast %6 : vector<8x1xf32> to vector<8x8xf32>
    %9 = vector.broadcast %7 : vector<1x8xf32> to vector<8x8xf32>
    %10 = arith.addf %8, %9 : vector<8x8xf32>
    %cst_8 = arith.constant 2.000000e+00 : f32
    %11 = vector.broadcast %cst_8 : f32 to vector<8x8xf32>
    %12 = arith.mulf %11, %5 : vector<8x8xf32>
    %13 = arith.subf %10, %12 : vector<8x8xf32>
    %c0_9 = arith.constant 0 : index
    %c0_10 = arith.constant 0 : index
    %14 = vector.load %arg4[%c0_9, %c0_10] : memref<8x1xi32, #tpu.memory_space<vmem>>, vector<8x1xi32>
    %c0_11 = arith.constant 0 : index
    %c0_12 = arith.constant 0 : index
    %15 = vector.load %arg5[%c0_11, %c0_12] : memref<1x8xi32, #tpu.memory_space<vmem>>, vector<1x8xi32>
    %16 = vector.broadcast %14 : vector<8x1xi32> to vector<8x8xi32>
    %17 = vector.broadcast %15 : vector<1x8xi32> to vector<8x8xi32>
    %18 = arith.cmpi eq, %16, %17 : vector<8x8xi32>
    %19 = tpu.iota {dimensions = array<i32: 1>} : vector<8x8xi32>
    %c8_i32 = arith.constant 8 : i32
    %20 = arith.muli %arg1, %c8_i32 : i32
    %21 = vector.broadcast %20 : i32 to vector<8x8xi32>
    %22 = arith.addi %19, %21 : vector<8x8xi32>
    %c8_i32_13 = arith.constant 8 : i32
    %23 = vector.broadcast %c8_i32_13 : i32 to vector<8x8xi32>
    %24 = arith.cmpi slt, %22, %23 : vector<8x8xi32>
    %25 = arith.andi %18, %24 : vector<8x8xi1>
    %cst_14 = arith.constant 0xFF800000 : f32
    %26 = vector.broadcast %cst_14 : f32 to vector<8x8xf32>
    %27 = arith.select %25, %13, %26 : vector<8x8xi1>, vector<8x8xf32>
    %cst_15 = arith.constant dense<true> : vector<8x8xi1>
    %28 = arith.xori %18, %cst_15 : vector<8x8xi1>
    %29 = arith.andi %28, %24 : vector<8x8xi1>
    %cst_16 = arith.constant 0x7F800000 : f32
    %30 = vector.broadcast %cst_16 : f32 to vector<8x8xf32>
    %31 = arith.select %29, %13, %30 : vector<8x8xi1>, vector<8x8xf32>
    %c0_17 = arith.constant 0 : index
    %c0_18 = arith.constant 0 : index
    %32 = vector.load %arg9[%c0_17, %c0_18] : memref<8x1xf32, #tpu.memory_space<vmem>>, vector<8x1xf32>
    %cst_19 = arith.constant dense<0xFF800000> : vector<8xf32>
    %33 = vector.multi_reduction <maximumf>, %27, %cst_19 [1] : vector<8x8xf32> to vector<8xf32>
    %34 = vector.shape_cast %33 : vector<8xf32> to vector<8x1xf32>
    %35 = arith.maximumf %32, %34 : vector<8x1xf32>
    %c0_20 = arith.constant 0 : index
    %c0_21 = arith.constant 0 : index
    %36 = vector.load %arg9[%c0_20, %c0_21] : memref<8x1xf32, #tpu.memory_space<vmem>>, vector<8x1xf32>
    tpu.vector_store %arg9[%c0_20, %c0_21], %35 {strides = array<i32>} : memref<8x1xf32, #tpu.memory_space<vmem>>, vector<8x1xf32>,
    %c0_22 = arith.constant 0 : index
    %c0_23 = arith.constant 0 : index
    %37 = vector.load %arg10[%c0_22, %c0_23] : memref<8x1xf32, #tpu.memory_space<vmem>>, vector<8x1xf32>
    %cst_24 = arith.constant dense<0x7F800000> : vector<8xf32>
    %38 = vector.multi_reduction <minimumf>, %31, %cst_24 [1] : vector<8x8xf32> to vector<8xf32>
    %39 = vector.shape_cast %38 : vector<8xf32> to vector<8x1xf32>
    %40 = arith.minimumf %37, %39 : vector<8x1xf32>
    %c0_25 = arith.constant 0 : index
    %c0_26 = arith.constant 0 : index
    %41 = vector.load %arg10[%c0_25, %c0_26] : memref<8x1xf32, #tpu.memory_space<vmem>>, vector<8x1xf32>
    tpu.vector_store %arg10[%c0_25, %c0_26], %40 {strides = array<i32>} : memref<8x1xf32, #tpu.memory_space<vmem>>, vector<8x1xf32>,
    %c0_i32_27 = arith.constant 0 : i32
    %42 = arith.cmpi eq, %arg1, %c0_i32_27 : i32
    %43 = arith.extui %42 : i1 to i32
    %c0_i32_28 = arith.constant 0 : i32
    %44 = arith.cmpi ne, %43, %c0_i32_28 : i32
    scf.if %44 {
      %c0_29 = arith.constant 0 : index
      %c0_30 = arith.constant 0 : index
      %45 = vector.load %arg9[%c0_29, %c0_30] : memref<8x1xf32, #tpu.memory_space<vmem>>, vector<8x1xf32>
      %cst_31 = arith.constant 9.99999996E-13 : f32
      %46 = vector.broadcast %cst_31 : f32 to vector<8x1xf32>
      %47 = arith.maximumf %45, %46 : vector<8x1xf32>
      %48 = math.sqrt %47 : vector<8x1xf32>
      %c0_32 = arith.constant 0 : index
      %c0_33 = arith.constant 0 : index
      %49 = vector.load %arg10[%c0_32, %c0_33] : memref<8x1xf32, #tpu.memory_space<vmem>>, vector<8x1xf32>
      %cst_34 = arith.constant 9.99999996E-13 : f32
      %50 = vector.broadcast %cst_34 : f32 to vector<8x1xf32>
      %51 = arith.maximumf %49, %50 : vector<8x1xf32>
      %52 = math.sqrt %51 : vector<8x1xf32>
      %53 = arith.subf %48, %52 : vector<8x1xf32>
      %cst_35 = arith.constant 3.000000e-01 : f32
      %54 = vector.broadcast %cst_35 : f32 to vector<8x1xf32>
      %55 = arith.addf %53, %54 : vector<8x1xf32>
      %cst_36 = arith.constant 0.000000e+00 : f32
      %56 = vector.broadcast %cst_36 : f32 to vector<8x1xf32>
      %57 = arith.maximumf %55, %56 : vector<8x1xf32>
      %c0_37 = arith.constant 0 : index
      %c0_38 = arith.constant 0 : index
      %58 = vector.load %arg8[%c0_37, %c0_38] : memref<8x1xf32, #tpu.memory_space<vmem>>, vector<8x1xf32>
      tpu.vector_store %arg8[%c0_37, %c0_38], %57 {strides = array<i32>} : memref<8x1xf32, #tpu.memory_space<vmem>>, vector<8x1xf32>,
    } else {
    }
    return
  }
  func.func @transform_0(%arg0: i32, %arg1: i32) -> (i32, i32) {
    %c0_i32 = arith.constant 0 : i32
    %c0_i32_0 = arith.constant 0 : i32
    return %arg0, %c0_i32 : i32, i32
  }
  func.func @transform_1(%arg0: i32, %arg1: i32) -> (i32, i32) {
    %c0_i32 = arith.constant 0 : i32
    %c0_i32_0 = arith.constant 0 : i32
    return %arg1, %c0_i32 : i32, i32
  }
  func.func @transform_2(%arg0: i32, %arg1: i32) -> (i32, i32) {
    %c0_i32 = arith.constant 0 : i32
    %c0_i32_0 = arith.constant 0 : i32
    return %arg0, %c0_i32 : i32, i32
  }
  func.func @transform_3(%arg0: i32, %arg1: i32) -> (i32, i32) {
    %c0_i32 = arith.constant 0 : i32
    %c0_i32_0 = arith.constant 0 : i32
    return %c0_i32, %arg1 : i32, i32
  }
  func.func @transform_4(%arg0: i32, %arg1: i32) -> (i32, i32) {
    %c0_i32 = arith.constant 0 : i32
    %c0_i32_0 = arith.constant 0 : i32
    return %arg0, %c0_i32 : i32, i32
  }
  func.func @transform_5(%arg0: i32, %arg1: i32) -> (i32, i32) {
    %c0_i32 = arith.constant 0 : i32
    %c0_i32_0 = arith.constant 0 : i32
    return %c0_i32, %arg1 : i32, i32
  }
  func.func @transform_6(%arg0: i32, %arg1: i32) -> (i32, i32) {
    %c0_i32 = arith.constant 0 : i32
    %c0_i32_0 = arith.constant 0 : i32
    return %arg0, %c0_i32 : i32, i32
  }
}

</mosaic_0001>

<llo_original>
// kernel: tpu_custom_call.1
$region0: #{tpu_custom_call.1}
  #allocation0 [shape = 'u32[]', space=smem, size = 0x4, offset = 0x4, fixed_abs, tag = 'smem constant byte address 0x4 - core index']
  #allocation1 [shape = 'u32[144,128]{1,0:T(1,128)}', space=vmem, size = 0x12000, scoped, tag = 'internal scratch']
  #allocation2 [shape = 'f32[8,1]{1,0:T(8,128)}', space=vmem, size = 0x1000, scoped, tag = 'scratch operand']
  #allocation3 [shape = 'f32[8,1]{1,0:T(8,128)}', space=vmem, size = 0x1000, scoped, tag = 'scratch operand']
  %s0 = inlined_call_operand.vmem [shape: f32[8,128], index: 0, kind: input, shape index: {}]
  %s1 = inlined_call_operand.vmem [shape: f32[8,128], index: 1, kind: input, shape index: {}]
  %s2 = inlined_call_operand.vmem [shape: s32[8,1], index: 2, kind: input, shape index: {}]
  %s3 = inlined_call_operand.vmem [shape: s32[1,8], index: 3, kind: input, shape index: {}]
  %s4 = inlined_call_operand.vmem [shape: f32[8,1], index: 4, kind: input, shape index: {}]
  %s5 = inlined_call_operand.vmem [shape: f32[1,8], index: 5, kind: input, shape index: {}]
  %s6 = inlined_call_operand.vmem [shape: f32[8,1], index: 6, kind: output, shape index: {}]
  %s7 = sld [smem:[#allocation0]]
  $region42: #{tpu_custom_call.1} parent=0
    _
  %s9 = ssub.s32 1, %s7
  %s10 = scalar_select 0, %s9, %s7
  // Predicated region
  $region2: #{tpu_custom_call.1} parent=0 // pred_check
    _
  $region3: #{tpu_custom_call.1} parent=0 // pred_check_branch
    %12 = sbr.rel (0) target = $region5
  $region4: #{tpu_custom_call.1} parent=0 // pred_region
    _
  $region5: #{tpu_custom_call.1} parent=0 // pred_fallthru
    _
  // Predicated region
  $region6: #{tpu_custom_call.1} parent=0 // pred_check
    _
  $region7: #{tpu_custom_call.1} parent=0 // pred_check_branch
    %14 = sbr.rel (0) target = $region9
  $region8: #{tpu_custom_call.1} parent=0 // pred_region
    _
  $region9: #{tpu_custom_call.1} parent=0 // pred_fallthru
    _
  // Predicated region
  $region10: #{tpu_custom_call.1} parent=0 // pred_check
    _
  $region11: #{tpu_custom_call.1} parent=0 // pred_check_branch
    %16 = sbr.rel (0) target = $region13
  $region12: #{tpu_custom_call.1} parent=0 // pred_region
    _
  $region13: #{tpu_custom_call.1} parent=0 // pred_fallthru
    _
  // Predicated region
  $region14: #{tpu_custom_call.1} parent=0 // pred_check
    _
  $region15: #{tpu_custom_call.1} parent=0 // pred_check_branch
    %18 = sbr.rel (0) target = $region17
  $region16: #{tpu_custom_call.1} parent=0 // pred_region
    _
  $region17: #{tpu_custom_call.1} parent=0 // pred_fallthru
    _
  // Predicated region
  $region18: #{tpu_custom_call.1} parent=0 // pred_check
    _
  $region19: #{tpu_custom_call.1} parent=0 // pred_check_branch
    %20 = sbr.rel (0) target = $region21
  $region20: #{tpu_custom_call.1} parent=0 // pred_region
    _
  $region21: #{tpu_custom_call.1} parent=0 // pred_fallthru
    _
  // Predicated region
  $region22: #{tpu_custom_call.1} parent=0 // pred_check
    _
  $region23: #{tpu_custom_call.1} parent=0 // pred_check_branch
    %22 = sbr.rel (0) target = $region25
  $region24: #{tpu_custom_call.1} parent=0 // pred_region
    _
  $region25: #{tpu_custom_call.1} parent=0 // pred_fallthru
    _
  %p23 = scmp.eq.s32.totalorder 0, 0
  // Predicated region
  $region26: #{tpu_custom_call.1} parent=0 // pred_check
    %p24 = pneg %p23
  $region27: #{tpu_custom_call.1} parent=0 // pred_check_branch
    %26 = sbr.rel (%p24) target = $region29
  $region28: #{tpu_custom_call.1} parent=0 // pred_region
    %vm27 = vcmask 7168
    %28 = vst.msk [vmem:[#allocation2] sm:$0xff] %vm27, -inf
    %29 = vst.msk [vmem:[#allocation3] sm:$0xff] %vm27, inf
  $region29: #{tpu_custom_call.1} parent=0 // pred_fallthru
    _
  %v30 = vld [vmem:[%s0] sm:$0xff]
  %v31 = vld [vmem:[%s1] sm:$0xff]
  %32 = vmatprep.subr.mxu0 0.0
  %33 = vmatpush1.xpose.msra.mxu0 %v31
  %34 = vmatprep.subr.mxu0 0.0
  %35 = vmatpush1.xpose.msra.mxu0 0.0
  %36 = vmatprep.subr.mxu0 0.0
  %37 = vmatpush1.xpose.msra.mxu0 0.0
  %38 = vmatprep.subr.mxu0 0.0
  %39 = vmatpush1.xpose.msra.mxu0 0.0
  %40 = vmatprep.subr.mxu0 0.0
  %41 = vmatpush1.xpose.msra.mxu0 0.0
  %42 = vmatprep.subr.mxu0 0.0
  %43 = vmatpush1.xpose.msra.mxu0 0.0
  %44 = vmatprep.subr.mxu0 0.0
  %45 = vmatpush1.xpose.msra.mxu0 0.0
  %46 = vmatprep.subr.mxu0 0.0
  %47 = vmatpush1.xpose.msra.mxu0 0.0
  %48 = vmatprep.subr.mxu0 0.0
  %49 = vmatpush1.xpose.msra.mxu0 0.0
  %50 = vmatprep.subr.mxu0 0.0
  %51 = vmatpush1.xpose.msra.mxu0 0.0
  %52 = vmatprep.subr.mxu0 0.0
  %53 = vmatpush1.xpose.msra.mxu0 0.0
  %54 = vmatprep.subr.mxu0 0.0
  %55 = vmatpush1.xpose.msra.mxu0 0.0
  %56 = vmatprep.subr.mxu0 0.0
  %57 = vmatpush1.xpose.msra.mxu0 0.0
  %58 = vmatprep.subr.mxu0 0.0
  %59 = vmatpush1.xpose.msra.mxu0 0.0
  %60 = vmatprep.subr.mxu0 0.0
  %61 = vmatpush1.xpose.msra.mxu0 0.0
  %62 = vmatprep.subr.mxu0 0.0
  %63 = vmatpush1.xpose.msra.mxu0 0.0
  %64 = vmatprep.subr.mxu0 0.0
  %65 = vmatpush1.xpose.msra.mxu0 0.0
  %66 = vmatprep.subr.mxu0 0.0
  %67 = vmatpush1.xpose.msra.mxu0 0.0
  %68 = vmatprep.subr.mxu0 0.0
  %69 = vmatpush1.xpose.msra.mxu0 0.0
  %70 = vmatprep.subr.mxu0 0.0
  %71 = vmatpush1.xpose.msra.mxu0 0.0
  %72 = vmatprep.subr.mxu0 0.0
  %73 = vmatpush1.xpose.msra.mxu0 0.0
  %74 = vmatprep.subr.mxu0 0.0
  %75 = vmatpush1.xpose.msra.mxu0 0.0
  %76 = vmatprep.subr.mxu0 0.0
  %77 = vmatpush1.xpose.msra.mxu0 0.0
  %78 = vmatprep.subr.mxu0 0.0
  %79 = vmatpush1.xpose.msra.mxu0 0.0
  %80 = vmatprep.subr.mxu0 0.0
  %81 = vmatpush1.xpose.msra.mxu0 0.0
  %82 = vmatprep.subr.mxu0 0.0
  %83 = vmatpush1.xpose.msra.mxu0 0.0
  %84 = vmatprep.subr.mxu0 0.0
  %85 = vmatpush1.xpose.msra.mxu0 0.0
  %86 = vmatprep.subr.mxu0 0.0
  %87 = vmatpush1.xpose.msra.mxu0 0.0
  %88 = vmatprep.subr.mxu0 0.0
  %89 = vmatpush1.xpose.msra.mxu0 0.0
  %90 = vmatprep.subr.mxu0 0.0
  %91 = vmatpush1.xpose.msra.mxu0 0.0
  %92 = vmatprep.subr.mxu0 0.0
  %93 = vmatpush1.xpose.msra.mxu0 0.0
  %94 = vmatprep.subr.mxu0 0.0
  %95 = vmatpush1.xpose.msra.mxu0 0.0
  %96 = vmatprep.mubr.f32.mxu0 0.0
  %97 = vmatmul.mubr.f32.gmra.mrb[0].mxu0 %v30
  %v98 = vpop.f32.mrb[0].mxu0
  %v99 = vadd.f32 0.0, %v98
  %v100 = vpop.f32.mrb[0].mxu0
  %101 = vdwg.mxu0
  %v102 = vld [vmem:[%s4] sm:$0xff]
  %v103 = vld [vmem:[%s5] sm:$0x1]
  %105 = vset.pattern.permute.xlu0 0
  %106 = vperm.xlu0 %105, %v102
  %v107 = vpop.permute.xlu0 %106
  %v110 = vlaneseq
  %v111 = vshrl.u32 %v110, 7
  %v112 = vsub.s32 0, %v111
  %v113 = vrot.slane %v103, %v112
  %v115 = vadd.f32 %v107, %v113
  %v116 = vmul.f32 %v99, 2.0
  %v117 = vsub.f32 %v115, %v116
  %v118 = vld [vmem:[%s2] sm:$0xff]
  %v119 = vld [vmem:[%s3] sm:$0x1]
  %120 = vset.pattern.permute.xlu0 0
  %121 = vperm.xlu0 %120, %v118
  %v122 = vpop.permute.xlu0 %121
  %v123 = vlaneseq
  %v124 = vshrl.u32 %v123, 7
  %v125 = vsub.s32 0, %v124
  %v126 = vrot.slane %v119, %v125
  %vm127 = vcmp.eq.s32.totalorder %v122, %v126
  %v128 = vlaneseq
  %v129 = vand.u32 %v128, 127
  %s130 = smul.u32 0, 8
  %v131 = vstv %s130
  %v132 = vadd.s32 %v129, %v131
  %vm133 = vcmp.lt.s32.totalorder %v132, 8
  %vm134 = vmand %vm127, %vm133
  %v135 = vsel %vm134, %v117, -inf
  %vm136 = vmxor %vm127, 1
  %vm137 = vmand %vm136, %vm133
  %v138 = vsel %vm137, %v117, inf
  %v139 = vld [vmem:[#allocation2] sm:$0xff]
  %vm140 = vcmask 64512
  %v141 = vsel %vm140, %v135, -inf
  %142 = vmax.xlane.f32.xlu0 %v141
  %v143 = vpop.xlane.xlu0 %142
  %v144 = vmax.f32 %v139, %v143
  %vm145 = vcmask 7168
  %146 = vst.msk [vmem:[#allocation2] sm:$0xff] %vm145, %v144
  %v147 = vld [vmem:[#allocation3] sm:$0xff]
  %v148 = vsel %vm140, %v138, inf
  %149 = vmin.xlane.f32.xlu0 %v148
  %v150 = vpop.xlane.xlu0 %149
  %v151 = vmin.f32 %v147, %v150
  %152 = vst.msk [vmem:[#allocation3] sm:$0xff] %vm145, %v151
  // Predicated region
  $region30: #{tpu_custom_call.1} parent=0 // pred_check
    %p153 = pneg %p23
  $region31: #{tpu_custom_call.1} parent=0 // pred_check_branch
    %155 = sbr.rel (%p153) target = $region33
  $region32: #{tpu_custom_call.1} parent=0 // pred_region
    %v156 = vld [vmem:[#allocation2] sm:$0xff]
    %v157 = vmax.f32 %v156, 1e-12
    %v158 = vrsqrt.pop %v157
    %v159 = vmul.f32 %v157, %v158
    %vm160 = vcmp.eq.f32.partialorder %v157, inf
    %v161 = vsel %vm160, %v157, %v159
    %vm162 = vcmp.eq.f32.partialorder %v157, 0.0
    %v163 = vand.u32 %v157, 2147483648
    %v164 = vsel %vm162, %v163, %v161
    %v165 = vld [vmem:[#allocation3] sm:$0xff]
    %v166 = vmax.f32 %v165, 1e-12
    %v167 = vrsqrt.pop %v166
    %v168 = vmul.f32 %v166, %v167
    %vm169 = vcmp.eq.f32.partialorder %v166, inf
    %v170 = vsel %vm169, %v166, %v168
    %vm171 = vcmp.eq.f32.partialorder %v166, 0.0
    %v172 = vand.u32 %v166, 2147483648
    %v173 = vsel %vm171, %v172, %v170
    %v174 = vsub.f32 %v164, %v173
    %v175 = vadd.f32 %v174, 0.3
    %v176 = vmax.f32 %v175, 0.0
    %177 = vst.msk [vmem:[%s6] sm:$0xff] %vm145, %v176
  $region33: #{tpu_custom_call.1} parent=0 // pred_fallthru
    _
  // Predicated region
  $region34: #{tpu_custom_call.1} parent=0 // pred_check
    _
  $region35: #{tpu_custom_call.1} parent=0 // pred_check_branch
    %179 = sbr.rel (0) target = $region37
  $region36: #{tpu_custom_call.1} parent=0 // pred_region
    _
  $region37: #{tpu_custom_call.1} parent=0 // pred_fallthru
    _
  // Predicated region
  $region38: #{tpu_custom_call.1} parent=0 // pred_check
    _
  $region39: #{tpu_custom_call.1} parent=0 // pred_check_branch
    %181 = sbr.rel (0) target = $region41
  $region40: #{tpu_custom_call.1} parent=0 // pred_region
    _
  $region41: #{tpu_custom_call.1} parent=0 // pred_fallthru
    _

</llo_original>
